<compile_context>
chip_gen: v6e
topology: v6e:2x2x1
jax: 0.10.0
libtpu: 0.0.40
codegen_flags: <defaults>
</compile_context>

<pallas_src>
import math
import functools

import jax
import jax.numpy as jnp
from jax import lax
from jax.experimental import pallas as pl
from jax.experimental.pallas import tpu as pltpu


PAD_NONE, PAD_QUERY, PAD_KEY, PAD_DENSE = 0, 1, 2, 3
ATTN_NONE, ATTN_BOOL, ATTN_FLOAT = 0, 1, 2


def _round_up(x, m):
    return ((x + m - 1) // m) * m


def _attn_kernel(*refs, scale, pad_mode, attn_kind, need_key_mask, lk_true, tk):
    """One grid step: one (q-tile, kv-tile) block of one flattened batch/head.

    refs layout: q, k, v, [pad], [attn], out, m_scratch, l_scratch, acc_scratch
      q:   (1, tq, D)       k/v: (1, tk, D)
      pad: (1, tq, 1) | (1, 1, tk) | (1, tq, tk)   (keep mask, >0 == keep)
      attn:(1, tq, tk)      out: (1, tq, D)
    """
    idx = 0
    q_ref = refs[idx]; idx += 1
    k_ref = refs[idx]; idx += 1
    v_ref = refs[idx]; idx += 1
    pad_ref = None
    if pad_mode != PAD_NONE:
        pad_ref = refs[idx]; idx += 1
    attn_ref = None
    if attn_kind != ATTN_NONE:
        attn_ref = refs[idx]; idx += 1
    o_ref = refs[idx]; idx += 1
    m_ref, l_ref, acc_ref = refs[idx], refs[idx + 1], refs[idx + 2]

    ki = pl.program_id(2)
    nk = pl.num_programs(2)

    @pl.when(ki == 0)
    def _init():
        m_ref[...] = jnp.full(m_ref.shape, -jnp.inf, dtype=jnp.float32)
        l_ref[...] = jnp.zeros(l_ref.shape, dtype=jnp.float32)
        acc_ref[...] = jnp.zeros(acc_ref.shape, dtype=jnp.float32)

    q = q_ref[0]          # (tq, D), native dtype (bf16 stays bf16 -> fast MXU)
    k = k_ref[0]          # (tk, D)
    v = v_ref[0]          # (tk, D)

    # Q @ K^T contracting the last dims (no K transpose / relayout), f32 acc.
    s = lax.dot_general(q, k, (((1,), (1,)), ((), ())),
                        preferred_element_type=jnp.float32)
    s = s * scale

    # torch ordering: padding fill(-inf) -> float mult -> bool fill(-inf)
    if pad_mode != PAD_NONE:
        s = jnp.where(pad_ref[0] > 0.0, s, -jnp.inf)
    if attn_kind == ATTN_FLOAT:
        s = s * attn_ref[0]
    elif attn_kind == ATTN_BOOL:
        s = jnp.where(attn_ref[0] > 0.0, s, -jnp.inf)

    if need_key_mask:  # out-of-range (padded) keys contribute nothing
        key_ids = ki * tk + lax.broadcasted_iota(jnp.int32, s.shape, 1)
        s = jnp.where(key_ids < lk_true, s, -jnp.inf)

    # ---- online softmax (f32) ----------------------------------------------
    m_prev = m_ref[...]                               # (tq, 1)
    m_cur = jnp.max(s, axis=-1, keepdims=True)
    m_new = jnp.maximum(m_prev, m_cur)
    m_safe = jnp.where(m_new == -jnp.inf, 0.0, m_new)  # guard fully-masked rows
    alpha = jnp.exp(m_prev - m_safe)                   # (tq, 1)
    p = jnp.exp(s - m_safe)                            # (tq, tk) f32

    l_ref[...] = alpha * l_ref[...] + jnp.sum(p, axis=-1, keepdims=True)
    acc_ref[...] = alpha * acc_ref[...] + jnp.dot(
        p.astype(v.dtype), v, preferred_element_type=jnp.float32)
    m_ref[...] = m_new

    @pl.when(ki == nk - 1)
    def _finalize():
        l = l_ref[...]
        out = acc_ref[...] * pl.reciprocal(l, approx=False)
        # fully-masked / NaN-poisoned rows -> 0 (matches torch's isnan fixup)
        out = jnp.where(jnp.isnan(out), 0.0, out)
        o_ref[0] = out.astype(o_ref.dtype)


@functools.partial(jax.jit,
                   static_argnames=("pad_mode", "attn_kind", "lk_true", "tq", "tk"))
def _attention_call(q, k, v, pad_arr, attn_arr, *, pad_mode, attn_kind,
                    lk_true, tq, tk):
    B, lq_pad, d = q.shape
    lk_pad = k.shape[1]
    nq = lq_pad // tq
    nk = lk_pad // tk
    scale = 1.0 / math.sqrt(d)

    in_specs = [
        pl.BlockSpec((1, tq, d), lambda b, qi, ki: (b, qi, 0)),
        pl.BlockSpec((1, tk, d), lambda b, qi, ki: (b, ki, 0)),
        pl.BlockSpec((1, tk, d), lambda b, qi, ki: (b, ki, 0)),
    ]
    inputs = [q, k, v]
    if pad_mode == PAD_QUERY:
        in_specs.append(pl.BlockSpec((1, tq, 1), lambda b, qi, ki: (b, qi, 0)))
        inputs.append(pad_arr)
    elif pad_mode == PAD_KEY:
        in_specs.append(pl.BlockSpec((1, 1, tk), lambda b, qi, ki: (b, 0, ki)))
        inputs.append(pad_arr)
    elif pad_mode == PAD_DENSE:
        in_specs.append(pl.BlockSpec((1, tq, tk), lambda b, qi, ki: (b, qi, ki)))
        inputs.append(pad_arr)
    if attn_kind != ATTN_NONE:
        in_specs.append(pl.BlockSpec((1, tq, tk), lambda b, qi, ki: (b, qi, ki)))
        inputs.append(attn_arr)

    kernel = functools.partial(
        _attn_kernel, scale=scale, pad_mode=pad_mode, attn_kind=attn_kind,
        need_key_mask=(lk_pad != lk_true), lk_true=lk_true, tk=tk)

    grid_spec = pltpu.PrefetchScalarGridSpec(
        num_scalar_prefetch=0,
        grid=(B, nq, nk),
        in_specs=in_specs,
        out_specs=pl.BlockSpec((1, tq, d), lambda b, qi, ki: (b, qi, 0)),
        scratch_shapes=[pltpu.VMEM((tq, 1), jnp.float32),
                        pltpu.VMEM((tq, 1), jnp.float32),
                        pltpu.VMEM((tq, d), jnp.float32)],
    )

    return pl.pallas_call(
        kernel,
        out_shape=jax.ShapeDtypeStruct((B, lq_pad, d), q.dtype),
        grid_spec=grid_spec,
        compiler_params=pltpu.CompilerParams(
            dimension_semantics=("parallel", "parallel", "arbitrary")),
    )(*inputs)


def dot_product_attention(Q, K, V, padding_mask=None, attention_mask=None,
                          is_query_mask=True):
    """JAX/Pallas equivalent of DotProductAttention.forward."""
    assert Q.ndim == K.ndim and K.ndim == V.ndim
    *batch, Lq, D = Q.shape
    Lk = K.shape[-2]
    batch = tuple(batch)
    attn_shape = batch + (Lq, Lk)
    attn_ndim = len(attn_shape)
    B = 1
    for b in batch:
        B *= int(b)

    # ---- compact the padding mask -------------------------------------------
    pad_mode = PAD_NONE
    pad_arr = None
    if padding_mask is not None:
        assert padding_mask.dtype == jnp.bool_
        pm = padding_mask
        if attn_ndim - pm.ndim == 1:
            if is_query_mask:
                pad_mode = PAD_QUERY
                pm_b = jnp.broadcast_to(pm, batch + (Lq,)).reshape(B, Lq, 1)
            else:
                pad_mode = PAD_KEY
                pm_b = jnp.broadcast_to(pm, batch + (Lk,)).reshape(B, 1, Lk)
        else:
            assert pm.ndim == attn_ndim
            if pm.shape[-1] == 1:
                pad_mode = PAD_QUERY
                pm_b = jnp.broadcast_to(pm[..., 0], batch + (Lq,)).reshape(B, Lq, 1)
            elif pm.shape[-2] == 1:
                pad_mode = PAD_KEY
                pm_b = jnp.broadcast_to(pm[..., 0, :], batch + (Lk,)).reshape(B, 1, Lk)
            else:
                pad_mode = PAD_DENSE
                pm_b = jnp.broadcast_to(pm, attn_shape).reshape(B, Lq, Lk)
        pad_arr = pm_b.astype(jnp.float32)

    # ---- attention mask (only streamed if supplied) --------------------------
    attn_kind = ATTN_NONE
    attn_arr = None
    if attention_mask is not None:
        assert attention_mask.ndim == attn_ndim
        am = jnp.broadcast_to(attention_mask, attn_shape).reshape(B, Lq, Lk)
        attn_kind = ATTN_BOOL if attention_mask.dtype == jnp.bool_ else ATTN_FLOAT
        attn_arr = am.astype(jnp.float32)

    # ---- tile sizes + padding to tile multiples ------------------------------
    if Lq > 256:
        tq = 256
    else:
        tq = _round_up(Lq, 8)
    lq_pad = _round_up(Lq, tq)
    if Lk > 512:
        tk = 512
    else:
        tk = _round_up(Lk, 8)
    lk_pad = _round_up(Lk, tk)
    dq, dk = lq_pad - Lq, lk_pad - Lk

    Qf = Q.reshape(B, Lq, D)
    Kf = K.reshape(B, Lk, D)
    Vf = V.reshape(B, Lk, D)
    if dq:
        Qf = jnp.pad(Qf, ((0, 0), (0, dq), (0, 0)))
    if dk:
        Kf = jnp.pad(Kf, ((0, 0), (0, dk), (0, 0)))
        Vf = jnp.pad(Vf, ((0, 0), (0, dk), (0, 0)))
    if pad_arr is not None:
        if pad_mode == PAD_QUERY and dq:
            pad_arr = jnp.pad(pad_arr, ((0, 0), (0, dq), (0, 0)), constant_values=1.0)
        elif pad_mode == PAD_KEY and dk:
            pad_arr = jnp.pad(pad_arr, ((0, 0), (0, 0), (0, dk)), constant_values=1.0)
        elif pad_mode == PAD_DENSE and (dq or dk):
            pad_arr = jnp.pad(pad_arr, ((0, 0), (0, dq), (0, dk)), constant_values=1.0)
    if attn_arr is not None and (dq or dk):
        attn_arr = jnp.pad(attn_arr, ((0, 0), (0, dq), (0, dk)), constant_values=1.0)

    out = _attention_call(Qf, Kf, Vf, pad_arr, attn_arr,
                          pad_mode=pad_mode, attn_kind=attn_kind,
                          lk_true=Lk, tq=tq, tk=tk)
    out = out[:, :Lq, :]
    # TODO(synk): pack small heads (D < 128) into lane-dense output slabs and
    # batch several heads per grid step to better fill the MXU for tiny shapes.
    return out.reshape(*batch, Lq, D)


def _reference(Q, K, V, padding_mask=None, attention_mask=None,
               is_query_mask=True):
    """Pure-JAX reference mirroring the PyTorch forward, for validation."""
    D = K.shape[-1]
    s = jnp.einsum("...qd,...kd->...qk", Q, K) / math.sqrt(D)
    if padding_mask is not None:
        pm = padding_mask
        if is_query_mask:
            if s.ndim - pm.ndim == 1:
                pm = pm[..., None]
        elif s.ndim - pm.ndim == 1:
            pm = pm[..., None, :]
        s = jnp.where(pm, s, -jnp.inf)
    if attention_mask is not None:
        if attention_mask.dtype == jnp.bool_:
            s = jnp.where(attention_mask, s, -jnp.inf)
        else:
            s = s * attention_mask
    attn = jax.nn.softmax(s, axis=-1)
    attn = jnp.where(jnp.isnan(attn), 0.0, attn)
    return jnp.einsum("...qk,...kd->...qd", attn, V)


if __name__ == "__main__":
    key = jax.random.PRNGKey(0)
    kq, kk, kv, kp, ka, kf = jax.random.split(key, 6)

    N, H, Lq, Lk, D = 2, 2, 8, 8, 32
    Q = jax.random.normal(kq, (N, H, Lq, D), jnp.float32)
    K = jax.random.normal(kk, (N, H, Lk, D), jnp.float32)
    V = jax.random.normal(kv, (N, H, Lk, D), jnp.float32)

    # 1) query padding mask (some fully-masked rows)
    padding_mask = jax.random.uniform(kp, (N, H, Lq)) > 0.3
    out = jax.block_until_ready(dot_product_attention(
        Q, K, V, padding_mask=padding_mask, is_query_mask=True))
    ref = _reference(Q, K, V, padding_mask=padding_mask, is_query_mask=True)
    assert out.shape == (N, H, Lq, D)
    assert jnp.allclose(out, ref, atol=1e-5, rtol=1e-5), "mismatch (query pad mask)"

    # 2) key padding mask
    key_mask = jax.random.uniform(ka, (N, H, Lk)) > 0.3
    out = jax.block_until_ready(dot_product_attention(
        Q, K, V, padding_mask=key_mask, is_query_mask=False))
    ref = _reference(Q, K, V, padding_mask=key_mask, is_query_mask=False)
    assert jnp.allclose(out, ref, atol=1e-5, rtol=1e-5), "mismatch (key pad mask)"

    # 3) boolean attention mask
    bool_attn = jax.random.uniform(kf, (N, H, Lq, Lk)) > 0.4
    out = jax.block_until_ready(dot_product_attention(Q, K, V, attention_mask=bool_attn))
    ref = _reference(Q, K, V, attention_mask=bool_attn)
    assert jnp.allclose(out, ref, atol=1e-5, rtol=1e-5), "mismatch (bool attn mask)"

    # 4) float attention mask (positive) combined with a query padding mask
    float_attn = jax.random.uniform(kf, (N, H, Lq, Lk), minval=0.5, maxval=1.5)
    out = jax.block_until_ready(dot_product_attention(
        Q, K, V, padding_mask=padding_mask, attention_mask=float_attn))
    ref = _reference(Q, K, V, padding_mask=padding_mask, attention_mask=float_attn)
    assert jnp.allclose(out, ref, atol=1e-5, rtol=1e-5), "mismatch (float attn mask)"

    # 5) no masks
    out = jax.block_until_ready(dot_product_attention(Q, K, V))
    ref = _reference(Q, K, V)
    assert jnp.allclose(out, ref, atol=1e-5, rtol=1e-5), "mismatch (no mask)"

    # 6) bf16 inputs (kernel keeps bf16 into the MXU, f32 accumulation)
    Qb, Kb, Vb = (x.astype(jnp.bfloat16) for x in (Q, K, V))
    out = jax.block_until_ready(dot_product_attention(
        Qb, Kb, Vb, padding_mask=padding_mask, is_query_mask=True))
    ref = _reference(Qb.astype(jnp.float32), Kb.astype(jnp.float32),
                     Vb.astype(jnp.float32), padding_mask=padding_mask,
                     is_query_mask=True)
    assert jnp.allclose(out.astype(jnp.float32), ref, atol=5e-2, rtol=5e-2), \
        "mismatch (bf16)"

    # 7) ragged longer sequences -> exercises q/kv tiling, online softmax and
    #    padded-key masking (tq=256, tk=512, multiple kv tiles)
    N2, H2, Lq2, Lk2, D2 = 1, 2, 300, 640, 64
    kq2, kk2, kv2, kp2 = jax.random.split(jax.random.PRNGKey(1), 4)
    Q2 = jax.random.normal(kq2, (N2, H2, Lq2, D2), jnp.float32)
    K2 = jax.random.normal(kk2, (N2, H2, Lk2, D2), jnp.float32)
    V2 = jax.random.normal(kv2, (N2, H2, Lk2, D2), jnp.float32)
    key_mask2 = jax.random.uniform(kp2, (N2, H2, Lk2)) > 0.3
    out2 = jax.block_until_ready(dot_product_attention(
        Q2, K2, V2, padding_mask=key_mask2, is_query_mask=False))
    ref2 = _reference(Q2, K2, V2, padding_mask=key_mask2, is_query_mask=False)
    assert out2.shape == (N2, H2, Lq2, D2)
    assert jnp.allclose(out2, ref2, atol=1e-4, rtol=1e-4), "mismatch (tiled long seq)"

    print("KERNEL_OK")
</pallas_src>

<mosaic_0001>
module attributes {stable_mosaic.version = 11 : i64} {
  func.func @_attn_kernel(%arg0: i32, %arg1: i32, %arg2: i32, %arg3: memref<1x8x32xf32, #tpu.memory_space<vmem>>, %arg4: memref<1x8x32xf32, #tpu.memory_space<vmem>>, %arg5: memref<1x8x32xf32, #tpu.memory_space<vmem>>, %arg6: memref<1x8x1xf32, #tpu.memory_space<vmem>>, %arg7: memref<1x8x32xf32, #tpu.memory_space<vmem>>, %arg8: memref<8x1xf32, #tpu.memory_space<vmem>>, %arg9: memref<8x1xf32, #tpu.memory_space<vmem>>, %arg10: memref<8x32xf32, #tpu.memory_space<vmem>>) attributes {dimension_semantics = [#tpu.dimension_semantics<parallel>, #tpu.dimension_semantics<parallel>, #tpu.dimension_semantics<arbitrary>], iteration_bounds = array<i64: 4, 1, 1>, scalar_prefetch = 0 : i64, scratch_operands = 3 : i64, tpu.core_type = #tpu.core_type<tc>, window_params = [{transform_indices = @transform_0, window_bounds = array<i64: 1, 8, 32>}, {transform_indices = @transform_1, window_bounds = array<i64: 1, 8, 32>}, {transform_indices = @transform_2, window_bounds = array<i64: 1, 8, 32>}, {transform_indices = @transform_3, window_bounds = array<i64: 1, 8, 1>}, {transform_indices = @transform_4, window_bounds = array<i64: 1, 8, 32>}]} {
    %c0_i32 = arith.constant 0 : i32
    %0 = arith.cmpi eq, %arg2, %c0_i32 : i32
    %1 = arith.extui %0 : i1 to i32
    %c0_i32_0 = arith.constant 0 : i32
    %2 = arith.cmpi ne, %1, %c0_i32_0 : i32
    scf.if %2 {
      %cst_34 = arith.constant 0xFF800000 : f32
      %49 = vector.broadcast %cst_34 : f32 to vector<8x1xf32>
      %c0_35 = arith.constant 0 : index
      %c0_36 = arith.constant 0 : index
      %50 = vector.load %arg8[%c0_35, %c0_36] : memref<8x1xf32, #tpu.memory_space<vmem>>, vector<8x1xf32>
      tpu.vector_store %arg8[%c0_35, %c0_36], %49 {strides = array<i32>} : memref<8x1xf32, #tpu.memory_space<vmem>>, vector<8x1xf32>,
      %cst_37 = arith.constant 0.000000e+00 : f32
      %51 = vector.broadcast %cst_37 : f32 to vector<8x1xf32>
      %c0_38 = arith.constant 0 : index
      %c0_39 = arith.constant 0 : index
      %52 = vector.load %arg9[%c0_38, %c0_39] : memref<8x1xf32, #tpu.memory_space<vmem>>, vector<8x1xf32>
      tpu.vector_store %arg9[%c0_38, %c0_39], %51 {strides = array<i32>} : memref<8x1xf32, #tpu.memory_space<vmem>>, vector<8x1xf32>,
      %cst_40 = arith.constant 0.000000e+00 : f32
      %53 = vector.broadcast %cst_40 : f32 to vector<8x32xf32>
      %c0_41 = arith.constant 0 : index
      %c0_42 = arith.constant 0 : index
      %54 = vector.load %arg10[%c0_41, %c0_42] : memref<8x32xf32, #tpu.memory_space<vmem>>, vector<8x32xf32>
      tpu.vector_store %arg10[%c0_41, %c0_42], %53 {strides = array<i32>} : memref<8x32xf32, #tpu.memory_space<vmem>>, vector<8x32xf32>,
    } else {
    }
    %c0 = arith.constant 0 : index
    %c0_1 = arith.constant 0 : index
    %c0_2 = arith.constant 0 : index
    %3 = vector.load %arg3[%c0, %c0_1, %c0_2] : memref<1x8x32xf32, #tpu.memory_space<vmem>>, vector<1x8x32xf32>
    %4 = vector.shape_cast %3 : vector<1x8x32xf32> to vector<8x32xf32>
    %c0_3 = arith.constant 0 : index
    %c0_4 = arith.constant 0 : index
    %c0_5 = arith.constant 0 : index
    %5 = vector.load %arg4[%c0_3, %c0_4, %c0_5] : memref<1x8x32xf32, #tpu.memory_space<vmem>>, vector<1x8x32xf32>
    %6 = vector.shape_cast %5 : vector<1x8x32xf32> to vector<8x32xf32>
    %c0_6 = arith.constant 0 : index
    %c0_7 = arith.constant 0 : index
    %c0_8 = arith.constant 0 : index
    %7 = vector.load %arg5[%c0_6, %c0_7, %c0_8] : memref<1x8x32xf32, #tpu.memory_space<vmem>>, vector<1x8x32xf32>
    %8 = vector.shape_cast %7 : vector<1x8x32xf32> to vector<8x32xf32>
    %cst = arith.constant dense<0.000000e+00> : vector<8x8xf32>
    %9 = tpu.matmul %4, %6, %cst {dimension_numbers = #tpu.dot_dimension_numbers<[1], [1], [0], [0], [0, 0, 1, 0], [], []>} : vector<8x32xf32>, vector<8x32xf32>, vector<8x8xf32> -> vector<8x8xf32>
    %cst_9 = arith.constant 0.176776692 : f32
    %10 = vector.broadcast %cst_9 : f32 to vector<8x8xf32>
    %11 = arith.mulf %9, %10 : vector<8x8xf32>
    %c0_10 = arith.constant 0 : index
    %c0_11 = arith.constant 0 : index
    %c0_12 = arith.constant 0 : index
    %12 = vector.load %arg6[%c0_10, %c0_11, %c0_12] : memref<1x8x1xf32, #tpu.memory_space<vmem>>, vector<1x8x1xf32>
    %13 = vector.shape_cast %12 : vector<1x8x1xf32> to vector<8x1xf32>
    %cst_13 = arith.constant 0.000000e+00 : f32
    %14 = vector.broadcast %cst_13 : f32 to vector<8x1xf32>
    %15 = arith.cmpf ogt, %13, %14 : vector<8x1xf32>
    %cst_14 = arith.constant 0xFF800000 : f32
    %16 = vector.shape_cast %15 : vector<8x1xi1> to vector<8x1xi1>
    %17 = vector.broadcast %16 : vector<8x1xi1> to vector<8x8xi1>
    %18 = vector.broadcast %cst_14 : f32 to vector<8x8xf32>
    %19 = arith.select %17, %11, %18 : vector<8x8xi1>, vector<8x8xf32>
    %c0_15 = arith.constant 0 : index
    %c0_16 = arith.constant 0 : index
    %20 = vector.load %arg8[%c0_15, %c0_16] : memref<8x1xf32, #tpu.memory_space<vmem>>, vector<8x1xf32>
    %cst_17 = arith.constant dense<0xFF800000> : vector<8xf32>
    %21 = vector.multi_reduction <maximumf>, %19, %cst_17 [1] : vector<8x8xf32> to vector<8xf32>
    %22 = vector.shape_cast %21 : vector<8xf32> to vector<8x1xf32>
    %23 = arith.maximumf %20, %22 : vector<8x1xf32>
    %cst_18 = arith.constant 0xFF800000 : f32
    %24 = vector.broadcast %cst_18 : f32 to vector<8x1xf32>
    %25 = arith.cmpf oeq, %23, %24 : vector<8x1xf32>
    %cst_19 = arith.constant 0.000000e+00 : f32
    %26 = vector.broadcast %cst_19 : f32 to vector<8x1xf32>
    %27 = arith.select %25, %26, %23 : vector<8x1xi1>, vector<8x1xf32>
    %28 = arith.subf %20, %27 : vector<8x1xf32>
    %29 = math.exp %28 : vector<8x1xf32>
    %30 = vector.broadcast %27 : vector<8x1xf32> to vector<8x8xf32>
    %31 = arith.subf %19, %30 : vector<8x8xf32>
    %32 = math.exp %31 : vector<8x8xf32>
    %c0_20 = arith.constant 0 : index
    %c0_21 = arith.constant 0 : index
    %33 = vector.load %arg9[%c0_20, %c0_21] : memref<8x1xf32, #tpu.memory_space<vmem>>, vector<8x1xf32>
    %34 = arith.mulf %29, %33 : vector<8x1xf32>
    %cst_22 = arith.constant dense<0.000000e+00> : vector<8xf32>
    %35 = vector.multi_reduction <add>, %32, %cst_22 [1] : vector<8x8xf32> to vector<8xf32>
    %36 = vector.shape_cast %35 : vector<8xf32> to vector<8x1xf32>
    %37 = arith.addf %34, %36 : vector<8x1xf32>
    %c0_23 = arith.constant 0 : index
    %c0_24 = arith.constant 0 : index
    %38 = vector.load %arg9[%c0_23, %c0_24] : memref<8x1xf32, #tpu.memory_space<vmem>>, vector<8x1xf32>
    tpu.vector_store %arg9[%c0_23, %c0_24], %37 {strides = array<i32>} : memref<8x1xf32, #tpu.memory_space<vmem>>, vector<8x1xf32>,
    %c0_25 = arith.constant 0 : index
    %c0_26 = arith.constant 0 : index
    %39 = vector.load %arg10[%c0_25, %c0_26] : memref<8x32xf32, #tpu.memory_space<vmem>>, vector<8x32xf32>
    %40 = vector.broadcast %29 : vector<8x1xf32> to vector<8x32xf32>
    %41 = arith.mulf %40, %39 : vector<8x32xf32>
    %cst_27 = arith.constant dense<0.000000e+00> : vector<8x32xf32>
    %42 = tpu.matmul %32, %8, %cst_27 {dimension_numbers = #tpu.dot_dimension_numbers<[1], [0], [0], [1], [0, 0, 1, 1], [], []>} : vector<8x8xf32>, vector<8x32xf32>, vector<8x32xf32> -> vector<8x32xf32>
    %43 = arith.addf %41, %42 : vector<8x32xf32>
    %c0_28 = arith.constant 0 : index
    %c0_29 = arith.constant 0 : index
    %44 = vector.load %arg10[%c0_28, %c0_29] : memref<8x32xf32, #tpu.memory_space<vmem>>, vector<8x32xf32>
    tpu.vector_store %arg10[%c0_28, %c0_29], %43 {strides = array<i32>} : memref<8x32xf32, #tpu.memory_space<vmem>>, vector<8x32xf32>,
    %c0_30 = arith.constant 0 : index
    %c0_31 = arith.constant 0 : index
    %45 = vector.load %arg8[%c0_30, %c0_31] : memref<8x1xf32, #tpu.memory_space<vmem>>, vector<8x1xf32>
    tpu.vector_store %arg8[%c0_30, %c0_31], %23 {strides = array<i32>} : memref<8x1xf32, #tpu.memory_space<vmem>>, vector<8x1xf32>,
    %c0_i32_32 = arith.constant 0 : i32
    %46 = arith.cmpi eq, %arg2, %c0_i32_32 : i32
    %47 = arith.extui %46 : i1 to i32
    %c0_i32_33 = arith.constant 0 : i32
    %48 = arith.cmpi ne, %47, %c0_i32_33 : i32
    scf.if %48 {
      %c0_34 = arith.constant 0 : index
      %c0_35 = arith.constant 0 : index
      %49 = vector.load %arg9[%c0_34, %c0_35] : memref<8x1xf32, #tpu.memory_space<vmem>>, vector<8x1xf32>
      %c0_36 = arith.constant 0 : index
      %c0_37 = arith.constant 0 : index
      %50 = vector.load %arg10[%c0_36, %c0_37] : memref<8x32xf32, #tpu.memory_space<vmem>>, vector<8x32xf32>
      %51 = tpu.reciprocal %49 : vector<8x1xf32> -> vector<8x1xf32>
      %52 = vector.broadcast %51 : vector<8x1xf32> to vector<8x32xf32>
      %53 = arith.mulf %50, %52 : vector<8x32xf32>
      %54 = arith.cmpf one, %53, %53 : vector<8x32xf32>
      %cst_38 = arith.constant 0.000000e+00 : f32
      %55 = vector.broadcast %cst_38 : f32 to vector<8x32xf32>
      %56 = arith.select %54, %55, %53 : vector<8x32xi1>, vector<8x32xf32>
      %c0_39 = arith.constant 0 : index
      %c0_40 = arith.constant 0 : index
      %c0_41 = arith.constant 0 : index
      %57 = vector.load %arg7[%c0_39, %c0_40, %c0_41] : memref<1x8x32xf32, #tpu.memory_space<vmem>>, vector<1x8x32xf32>
      %58 = vector.shape_cast %57 : vector<1x8x32xf32> to vector<8x32xf32>
      %59 = vector.shape_cast %56 : vector<8x32xf32> to vector<1x8x32xf32>
      tpu.vector_store %arg7[%c0_39, %c0_40, %c0_41], %59 {strides = array<i32>} : memref<1x8x32xf32, #tpu.memory_space<vmem>>, vector<1x8x32xf32>,
    } else {
    }
    return
  }
  func.func @transform_0(%arg0: i32, %arg1: i32, %arg2: i32) -> (i32, i32, i32) {
    %c0_i32 = arith.constant 0 : i32
    %c0_i32_0 = arith.constant 0 : i32
    return %arg0, %arg1, %c0_i32 : i32, i32, i32
  }
  func.func @transform_1(%arg0: i32, %arg1: i32, %arg2: i32) -> (i32, i32, i32) {
    %c0_i32 = arith.constant 0 : i32
    %c0_i32_0 = arith.constant 0 : i32
    return %arg0, %arg2, %c0_i32 : i32, i32, i32
  }
  func.func @transform_2(%arg0: i32, %arg1: i32, %arg2: i32) -> (i32, i32, i32) {
    %c0_i32 = arith.constant 0 : i32
    %c0_i32_0 = arith.constant 0 : i32
    return %arg0, %arg2, %c0_i32 : i32, i32, i32
  }
  func.func @transform_3(%arg0: i32, %arg1: i32, %arg2: i32) -> (i32, i32, i32) {
    %c0_i32 = arith.constant 0 : i32
    %c0_i32_0 = arith.constant 0 : i32
    return %arg0, %arg1, %c0_i32 : i32, i32, i32
  }
  func.func @transform_4(%arg0: i32, %arg1: i32, %arg2: i32) -> (i32, i32, i32) {
    %c0_i32 = arith.constant 0 : i32
    %c0_i32_0 = arith.constant 0 : i32
    return %arg0, %arg1, %c0_i32 : i32, i32, i32
  }
}

</mosaic_0001>

<llo_original>
// kernel: _attention_call.1
$region0: #{_attention_call.1}
  #allocation0 [shape = 'u32[]', space=smem, size = 0x4, offset = 0x4, fixed_abs, tag = 'smem constant byte address 0x4 - core index']
  #allocation1 [shape = 'u32[144,128]{1,0:T(1,128)}', space=vmem, size = 0x12000, scoped, tag = 'internal scratch']
  #allocation2 [shape = 'f32[8,1]{1,0:T(8,128)}', space=vmem, size = 0x1000, scoped, tag = 'scratch operand']
  #allocation3 [shape = 'f32[8,1]{1,0:T(8,128)}', space=vmem, size = 0x1000, scoped, tag = 'scratch operand']
  #allocation4 [shape = 'f32[8,32]{1,0:T(8,128)}', space=vmem, size = 0x1000, scoped, tag = 'scratch operand']
  %s0 = inlined_call_operand.vmem [shape: f32[4,8,32], index: 0, kind: input, shape index: {}]
  %s1 = inlined_call_operand.hbm [shape: f32[4,8,32], index: 1, kind: input, shape index: {}]
  %s2 = inlined_call_operand.hbm [shape: f32[4,8,32], index: 2, kind: input, shape index: {}]
  %s3 = inlined_call_operand.vmem [shape: f32[4,8,1], index: 3, kind: input, shape index: {}]
  %s4 = inlined_call_operand.hbm [shape: f32[4,8,32], index: 4, kind: output, shape index: {}]
  %s5 = sld [smem:[#allocation0]]
  $region65: #{_attention_call.1} parent=0
    _
  %s7 = ssub.s32 1, %s5
  %s8 = scalar_select 0, %s7, %s5
  $region1: #{_attention_call.1} parent=0
    #allocation5 [shape = 'u8[8192]{0}', space=vmem, size = 0x2000, scoped, tag = 'input window, operand 1']
    #allocation6 [shape = 's32[2]{0}', space=sflag, size = 0x8, scoped, tag = 'scoped memory for _attention_call.1']
    #allocation7 [shape = 's32[2]{0}', space=sflag, size = 0x8, scoped, tag = 'scoped memory for _attention_call.1']
    #allocation8 [shape = 'u8[8192]{0}', space=vmem, size = 0x2000, scoped, tag = 'input window, operand 2']
    #allocation9 [shape = 's32[2]{0}', space=sflag, size = 0x8, scoped, tag = 'scoped memory for _attention_call.1']
    #allocation10 [shape = 'u8[8192]{0}', space=vmem, size = 0x2000, scoped, tag = 'output window, operand 0']
    %9 = vsyncpa [#allocation6], 0
    %s10 = scalar_lea.sflag [#allocation6], 1
    %11 = vsyncpa %s10, 0
    %12 = vsyncpa [#allocation9], 0
    %s13 = scalar_lea.sflag [#allocation9], 1
    %14 = vsyncpa %s13, 0
    %15 = vsyncpa [#allocation7], 0
    %s16 = scalar_lea.sflag [#allocation7], 1
    %17 = vsyncpa %s16, 0
    loop: start=0, step=1, limit=6
    $region2: #{_attention_call.1} parent=1 // loop_pre_header
      _
    $region3: #{_attention_call.1} parent=1 // loop_header
      %s19 = sphi 0, %s23
      %p20 = scmp.ge.s32.totalorder %s19, 6
      %s26 = sphi 0, %s45
      %s27 = sphi 0, %s41
      %s28 = sphi 0, %s37
      %s29 = sphi 0, %s26
      %s30 = sphi 0, %s27
      %s31 = sphi 0, %s28
      %s32 = sphi 0, %s29
      %s33 = sphi 0, %s30
      %s34 = sphi 0, %s31
      %s50 = sphi 0, %s52
      %s53 = sphi 0, %s50
      %s54 = sphi 0, %s53
      %s70 = sphi 0, %s54
      %s78 = sphi 0, %s80
      %s81 = sphi 0, %s78
      %s82 = sphi 0, %s81
      %s98 = sphi 0, %s82
      %s106 = sphi 0, %s108
      %s109 = sphi 0, %s106
      %s110 = sphi 0, %s109
      %s126 = sphi 0, %s110
      %s134 = sphi 0, %s136
      %s137 = sphi 0, %s134
      %s138 = sphi 0, %s137
      %s154 = sphi 0, %s138
      %s162 = sphi 0, %s164
      %s165 = sphi 0, %s162
      %s166 = sphi 0, %s165
      %s182 = sphi 0, %s166
    $region4: #{_attention_call.1} parent=1 // loop_header_branch
      %22 = sbr.rel (%p20) target = $region8
    $region5: #{_attention_call.1} parent=1 // loop_body
      %s24 = ssub.s32 %s19, 1
      %s25 = ssub.s32 %s19, 2
      %s35 = sadd.s32 1, %s28
      %p36 = scmp.ge.s32.totalorder %s35, 1
      %s37 = scalar_select %p36, 0, %s35
      %s38 = sadd.s32 1, %s27
      %s39 = scalar_select %p36, %s38, %s27
      %p40 = scmp.ge.s32.totalorder %s39, 1
      %s41 = scalar_select %p40, 0, %s39
      %s42 = sadd.s32 1, %s26
      %s43 = scalar_select %p40, %s42, %s26
      %p44 = scmp.ge.s32.totalorder %s43, 4
      %s45 = scalar_select %p44, 0, %s43
      %s46 = ssub.s32 %s26, %s45
      %s47 = ssub.s32 %s27, %s41
      %s48 = sor.u32 %s46, %s47
      %p49 = scmp.eq.s32.totalorder %s48, 0
      %s51 = sadd.s32 %s50, 1
      %s52 = scalar_select %p49, %s50, %s51
      %p55 = pneg %p49
      %p56 = scmp.eq.s32.totalorder %s19, 3
      %p57 = por %p55, %p56
      %p58 = scmp.ne.s32.totalorder %s50, %s53
      %p59 = scmp.eq.s32.totalorder %s19, 0
      %p60 = por %p58, %p59
      %p61 = scmp.ne.s32.totalorder %s50, %s53
      %p62 = scmp.eq.s32.totalorder %s24, 3
      %p63 = por %p61, %p62
      %p64 = scmp.ne.s32.totalorder %s53, %s54
      %p65 = scmp.eq.s32.totalorder %s24, 0
      %p66 = por %p64, %p65
      %p67 = scmp.ne.s32.totalorder %s53, %s54
      %p68 = scmp.eq.s32.totalorder %s25, 3
      %p69 = por %p67, %p68
      %p71 = scmp.ne.s32.totalorder %s54, %s70
      %p72 = scmp.eq.s32.totalorder %s25, 0
      %p73 = por %p71, %p72
      %s74 = ssub.s32 %s26, %s45
      %s75 = ssub.s32 %s28, %s37
      %s76 = sor.u32 %s74, %s75
      %p77 = scmp.eq.s32.totalorder %s76, 0
      %s79 = sadd.s32 %s78, 1
      %s80 = scalar_select %p77, %s78, %s79
      %p83 = pneg %p77
      %p84 = scmp.eq.s32.totalorder %s19, 3
      %p85 = por %p83, %p84
      %p86 = scmp.ne.s32.totalorder %s78, %s81
      %p87 = scmp.eq.s32.totalorder %s19, 0
      %p88 = por %p86, %p87
      %p89 = scmp.ne.s32.totalorder %s78, %s81
      %p90 = scmp.eq.s32.totalorder %s24, 3
      %p91 = por %p89, %p90
      %p92 = scmp.ne.s32.totalorder %s81, %s82
      %p93 = scmp.eq.s32.totalorder %s24, 0
      %p94 = por %p92, %p93
      %p95 = scmp.ne.s32.totalorder %s81, %s82
      %p96 = scmp.eq.s32.totalorder %s25, 3
      %p97 = por %p95, %p96
      %p99 = scmp.ne.s32.totalorder %s82, %s98
      %p100 = scmp.eq.s32.totalorder %s25, 0
      %p101 = por %p99, %p100
      %s102 = ssub.s32 %s26, %s45
      %s103 = ssub.s32 %s28, %s37
      %s104 = sor.u32 %s102, %s103
      %p105 = scmp.eq.s32.totalorder %s104, 0
      %s107 = sadd.s32 %s106, 1
      %s108 = scalar_select %p105, %s106, %s107
      %p111 = pneg %p105
      %p112 = scmp.eq.s32.totalorder %s19, 3
      %p113 = por %p111, %p112
      %p114 = scmp.ne.s32.totalorder %s106, %s109
      %p115 = scmp.eq.s32.totalorder %s19, 0
      %p116 = por %p114, %p115
      %p117 = scmp.ne.s32.totalorder %s106, %s109
      %p118 = scmp.eq.s32.totalorder %s24, 3
      %p119 = por %p117, %p118
      %p120 = scmp.ne.s32.totalorder %s109, %s110
      %p121 = scmp.eq.s32.totalorder %s24, 0
      %p122 = por %p120, %p121
      %p123 = scmp.ne.s32.totalorder %s109, %s110
      %p124 = scmp.eq.s32.totalorder %s25, 3
      %p125 = por %p123, %p124
      %p127 = scmp.ne.s32.totalorder %s110, %s126
      %p128 = scmp.eq.s32.totalorder %s25, 0
      %p129 = por %p127, %p128
      %s130 = ssub.s32 %s26, %s45
      %s131 = ssub.s32 %s27, %s41
      %s132 = sor.u32 %s130, %s131
      %p133 = scmp.eq.s32.totalorder %s132, 0
      %s135 = sadd.s32 %s134, 1
      %s136 = scalar_select %p133, %s134, %s135
      %p139 = pneg %p133
      %p140 = scmp.eq.s32.totalorder %s19, 3
      %p141 = por %p139, %p140
      %p142 = scmp.ne.s32.totalorder %s134, %s137
      %p143 = scmp.eq.s32.totalorder %s19, 0
      %p144 = por %p142, %p143
      %p145 = scmp.ne.s32.totalorder %s134, %s137
      %p146 = scmp.eq.s32.totalorder %s24, 3
      %p147 = por %p145, %p146
      %p148 = scmp.ne.s32.totalorder %s137, %s138
      %p149 = scmp.eq.s32.totalorder %s24, 0
      %p150 = por %p148, %p149
      %p151 = scmp.ne.s32.totalorder %s137, %s138
      %p152 = scmp.eq.s32.totalorder %s25, 3
      %p153 = por %p151, %p152
      %p155 = scmp.ne.s32.totalorder %s138, %s154
      %p156 = scmp.eq.s32.totalorder %s25, 0
      %p157 = por %p155, %p156
      %s158 = ssub.s32 %s26, %s45
      %s159 = ssub.s32 %s27, %s41
      %s160 = sor.u32 %s158, %s159
      %p161 = scmp.eq.s32.totalorder %s160, 0
      %s163 = sadd.s32 %s162, 1
      %s164 = scalar_select %p161, %s162, %s163
      %p167 = pneg %p161
      %p168 = scmp.eq.s32.totalorder %s19, 3
      %p169 = por %p167, %p168
      %p170 = scmp.ne.s32.totalorder %s162, %s165
      %p171 = scmp.eq.s32.totalorder %s19, 0
      %p172 = por %p170, %p171
      %p173 = scmp.ne.s32.totalorder %s162, %s165
      %p174 = scmp.eq.s32.totalorder %s24, 3
      %p175 = por %p173, %p174
      %p176 = scmp.ne.s32.totalorder %s165, %s166
      %p177 = scmp.eq.s32.totalorder %s24, 0
      %p178 = por %p176, %p177
      %p179 = scmp.ne.s32.totalorder %s165, %s166
      %p180 = scmp.eq.s32.totalorder %s25, 3
      %p181 = por %p179, %p180
      %p183 = scmp.ne.s32.totalorder %s166, %s182
      %p184 = scmp.eq.s32.totalorder %s25, 0
      %p185 = por %p183, %p184
      %p186 = scmp.le.s32.totalorder 1, %s19
      %p187 = scmp.lt.s32.totalorder %s19, 5
      %p188 = pnand %p186, %p187
      %p189 = pneg %p188
      // Predicated region
      $region9: #{_attention_call.1} parent=5 // pred_check
        _
      $region10: #{_attention_call.1} parent=5 // pred_check_branch
        %191 = sbr.rel (%p188) target = $region12
      $region11: #{_attention_call.1} parent=5 // pred_region
        %s192 = ssub.s32 %s19, 1
      $region12: #{_attention_call.1} parent=5 // pred_fallthru
        _
      %p193 = scmp.lt.s32.totalorder %s19, 4
      // Predicated region
      $region13: #{_attention_call.1} parent=5 // pred_check
        %p194 = pneg %p193
      $region14: #{_attention_call.1} parent=5 // pred_check_branch
        %196 = sbr.rel (%p194) target = $region16
      $region15: #{_attention_call.1} parent=5 // pred_region
        // Predicated region
        $region17: #{_attention_call.1} parent=15 // pred_check
          %p197 = pneg %p60
        $region18: #{_attention_call.1} parent=15 // pred_check_branch
          %199 = sbr.rel (%p197) target = $region20
        $region19: #{_attention_call.1} parent=15 // pred_region
          %p200 = scmp.lt.s32.totalorder %s26, 3
          %s201 = scalar_select %p200, %s26, 3
          %p202 = scmp.lt.s32.totalorder %s27, 0
          %s203 = scalar_select %p202, %s27, 0
          %s204 = sadd.s32 %s203, %s201
          %s205 = smul.addr %s204, 8
          %s206 = scalar_lea.vmem %s0, %s205
        $region20: #{_attention_call.1} parent=15 // pred_fallthru
          _
        // Predicated region
        $region21: #{_attention_call.1} parent=15 // pred_check
          %p207 = pneg %p88
        $region22: #{_attention_call.1} parent=15 // pred_check_branch
          %209 = sbr.rel (%p207) target = $region24
        $region23: #{_attention_call.1} parent=15 // pred_region
          %s210 = sand.u32 %s78, 1
          %s211 = scalar_lea.sflag [#allocation6], %s210
          %s212 = sand.u32 %s78, 1
          %s213 = smul.addr %s212, 8
          %s214 = scalar_lea.vmem [#allocation5], %s213
          %s216 = ssub.s32 128, 128
          %217 = vsyncadd %s211, %s216
          %s218 = sadd.s32 %s28, %s26
          %s219 = smul.addr %s218, 128
          %s220 = scalar_lea.hbm %s1, %s219
          %s222 = sshll.u32 %s214, 4
          %s223 = int_to_ptr.vmem [resolvable:$true] %s222
          %225 = dma.hbm_to_vmem [thread:$0]  %s220, 128, %s223, %s211
        $region24: #{_attention_call.1} parent=15 // pred_fallthru
          _
        // Predicated region
        $region25: #{_attention_call.1} parent=15 // pred_check
          %p226 = pneg %p116
        $region26: #{_attention_call.1} parent=15 // pred_check_branch
          %228 = sbr.rel (%p226) target = $region28
        $region27: #{_attention_call.1} parent=15 // pred_region
          %s229 = sand.u32 %s106, 1
          %s230 = scalar_lea.sflag [#allocation9], %s229
          %s231 = sand.u32 %s106, 1
          %s232 = smul.addr %s231, 8
          %s233 = scalar_lea.vmem [#allocation8], %s232
          %s235 = ssub.s32 128, 128
          %236 = vsyncadd %s230, %s235
          %s237 = sadd.s32 %s28, %s26
          %s238 = smul.addr %s237, 128
          %s239 = scalar_lea.hbm %s2, %s238
          %s241 = sshll.u32 %s233, 4
          %s242 = int_to_ptr.vmem [resolvable:$true] %s241
          %244 = dma.hbm_to_vmem [thread:$0]  %s239, 128, %s242, %s230
        $region28: #{_attention_call.1} parent=15 // pred_fallthru
          _
        // Predicated region
        $region29: #{_attention_call.1} parent=15 // pred_check
          %p245 = pneg %p144
        $region30: #{_attention_call.1} parent=15 // pred_check_branch
          %247 = sbr.rel (%p245) target = $region32
        $region31: #{_attention_call.1} parent=15 // pred_region
          %p248 = scmp.lt.s32.totalorder %s26, 3
          %s249 = scalar_select %p248, %s26, 3
          %p250 = scmp.lt.s32.totalorder %s27, 0
          %s251 = scalar_select %p250, %s27, 0
          %s252 = sadd.s32 %s251, %s249
          %s253 = smul.addr %s252, 8
          %s254 = scalar_lea.vmem %s3, %s253
        $region32: #{_attention_call.1} parent=15 // pred_fallthru
          _
      $region16: #{_attention_call.1} parent=5 // pred_fallthru
        _
      %p255 = scmp.le.s32.totalorder 1, %s19
      %p256 = scmp.lt.s32.totalorder %s19, 5
      %p257 = pnand %p255, %p256
      %p258 = pneg %p257
      // Predicated region
      $region33: #{_attention_call.1} parent=5 // pred_check
        _
      $region34: #{_attention_call.1} parent=5 // pred_check_branch
        %260 = sbr.rel (%p257) target = $region36
      $region35: #{_attention_call.1} parent=5 // pred_region
        %s261 = ssub.s32 %s19, 1
        %s262 = sand.u32 %s81, 1
        %s263 = scalar_lea.sflag [#allocation6], %s262
        %s264 = sand.u32 %s81, 1
        %s265 = smul.addr %s264, 8
        %s266 = scalar_lea.vmem [#allocation5], %s265
        // Predicated region
        $region37: #{_attention_call.1} parent=35 // pred_check
          %p267 = pneg %p94
        $region38: #{_attention_call.1} parent=35 // pred_check_branch
          %269 = sbr.rel (%p267) target = $region40
        $region39: #{_attention_call.1} parent=35 // pred_region
          %270 = dma.done %s263, 128
        $region40: #{_attention_call.1} parent=35 // pred_fallthru
          _
        %s271 = sand.u32 %s109, 1
        %s272 = scalar_lea.sflag [#allocation9], %s271
        %s273 = sand.u32 %s109, 1
        %s274 = smul.addr %s273, 8
        %s275 = scalar_lea.vmem [#allocation8], %s274
        // Predicated region
        $region41: #{_attention_call.1} parent=35 // pred_check
          %p276 = pneg %p122
        $region42: #{_attention_call.1} parent=35 // pred_check_branch
          %278 = sbr.rel (%p276) target = $region44
        $region43: #{_attention_call.1} parent=35 // pred_region
          %279 = dma.done %s272, 128
        $region44: #{_attention_call.1} parent=35 // pred_fallthru
          _
        %p280 = scmp.lt.s32.totalorder %s29, 3
        %s281 = scalar_select %p280, %s29, 3
        %p282 = scmp.lt.s32.totalorder %s30, 0
        %s283 = scalar_select %p282, %s30, 0
        %s284 = sadd.s32 %s283, %s281
        %s285 = smul.addr %s284, 8
        %s286 = scalar_lea.vmem %s0, %s285
        %p287 = pneg %p66
        %p288 = pneg %p63
        %s289 = sand.u32 %s81, 1
        %s290 = scalar_lea.sflag [#allocation6], %s289
        %s291 = sand.u32 %s81, 1
        %s292 = smul.addr %s291, 8
        %s293 = scalar_lea.vmem [#allocation5], %s292
        %p294 = pneg %p94
        %p295 = pneg %p91
        %s296 = sand.u32 %s109, 1
        %s297 = scalar_lea.sflag [#allocation9], %s296
        %s298 = sand.u32 %s109, 1
        %s299 = smul.addr %s298, 8
        %s300 = scalar_lea.vmem [#allocation8], %s299
        %p301 = pneg %p122
        %p302 = pneg %p119
        %p303 = scmp.lt.s32.totalorder %s29, 3
        %s304 = scalar_select %p303, %s29, 3
        %p305 = scmp.lt.s32.totalorder %s30, 0
        %s306 = scalar_select %p305, %s30, 0
        %s307 = sadd.s32 %s306, %s304
        %s308 = smul.addr %s307, 8
        %s309 = scalar_lea.vmem %s3, %s308
        %p310 = pneg %p150
        %p311 = pneg %p147
        %p312 = pneg %p178
        %p313 = pneg %p175
        %s314 = sand.u32 %s165, 1
        %s315 = scalar_lea.sflag [#allocation7], %s314
        %s316 = sand.u32 %s165, 1
        %s317 = smul.addr %s316, 8
        %s318 = scalar_lea.vmem [#allocation10], %s317
        %p319 = scmp.lt.s32.totalorder %s29, 3
        %s320 = scalar_select %p319, %s29, 3
        %p321 = scmp.lt.s32.totalorder %s30, 0
        %s322 = scalar_select %p321, %s30, 0
        %s323 = sadd.s32 %s322, %s320
        %s324 = smul.addr %s323, 8
        %s325 = scalar_lea.vmem %s0, %s324
        %p326 = scmp.lt.s32.totalorder %s29, 3
        %s327 = scalar_select %p326, %s29, 3
        %p328 = scmp.lt.s32.totalorder %s30, 0
        %s329 = scalar_select %p328, %s30, 0
        %s330 = sadd.s32 %s329, %s327
        %s331 = smul.addr %s330, 8
        %s332 = scalar_lea.vmem %s3, %s331
        %p333 = scmp.eq.s32.totalorder %s31, 0
        // Predicated region
        $region45: #{_attention_call.1} parent=35 // pred_check
          %p334 = pneg %p333
        $region46: #{_attention_call.1} parent=35 // pred_check_branch
          %336 = sbr.rel (%p334) target = $region48
        $region47: #{_attention_call.1} parent=35 // pred_region
          %vm337 = vcmask 7168
          %338 = vst.msk [vmem:[#allocation2] sm:$0xff] %vm337, -inf
          %339 = vst.msk [vmem:[#allocation3] sm:$0xff] %vm337, 0.0
          %vm340 = vcmask 261120
          %341 = vst.msk [vmem:[#allocation4] sm:$0xff] %vm340, 0.0
        $region48: #{_attention_call.1} parent=35 // pred_fallthru
          _
        %v342 = vld [vmem:[%s325] sm:$0xff]
        %v343 = vld [vmem:[%s266] sm:$0xff]
        %v344 = vld [vmem:[%s275] sm:$0xff]
        %vm345 = vcmask 261120
        %v347 = vsel %vm345, %v342, 0
        %v350 = vsel %vm345, %v343, 0
        %352 = vmatprep.subr.mxu0 0.0
        %353 = vmatpush1.xpose.msra.mxu0 0.0
        %354 = vmatprep.subr.mxu0 0.0
        %355 = vmatpush1.xpose.msra.mxu0 0.0
        %356 = vmatprep.subr.mxu0 0.0
        %357 = vmatpush1.xpose.msra.mxu0 0.0
        %358 = vmatprep.subr.mxu0 0.0
        %359 = vmatpush1.xpose.msra.mxu0 0.0
        %360 = vmatprep.subr.mxu0 0.0
        %361 = vmatpush1.xpose.msra.mxu0 0.0
        %362 = vmatprep.subr.mxu0 0.0
        %363 = vmatpush1.xpose.msra.mxu0 0.0
        %364 = vmatprep.subr.mxu0 0.0
        %365 = vmatpush1.xpose.msra.mxu0 0.0
        %366 = vmatprep.subr.mxu0 0.0
        %367 = vmatpush1.xpose.msra.mxu0 0.0
        %368 = vmatprep.subr.mxu0 0.0
        %369 = vmatpush1.xpose.msra.mxu0 0.0
        %370 = vmatprep.subr.mxu0 0.0
        %371 = vmatpush1.xpose.msra.mxu0 0.0
        %372 = vmatprep.subr.mxu0 0.0
        %373 = vmatpush1.xpose.msra.mxu0 0.0
        %374 = vmatprep.subr.mxu0 0.0
        %375 = vmatpush1.xpose.msra.mxu0 0.0
        %376 = vmatprep.subr.mxu0 0.0
        %377 = vmatpush1.xpose.msra.mxu0 0.0
        %378 = vmatprep.subr.mxu0 0.0
        %379 = vmatpush1.xpose.msra.mxu0 0.0
        %380 = vmatprep.subr.mxu0 0.0
        %381 = vmatpush1.xpose.msra.mxu0 0.0
        %382 = vmatprep.subr.mxu0 0.0
        %383 = vmatpush1.xpose.msra.mxu0 %v350
        %384 = vmatprep.subr.mxu0 0.0
        %385 = vmatpush2.xpose.msra.mxu0 0.0
        %386 = vmatprep.subr.mxu0 0.0
        %387 = vmatpush2.xpose.msra.mxu0 0.0
        %388 = vmatprep.subr.mxu0 0.0
        %389 = vmatpush2.xpose.msra.mxu0 0.0
        %390 = vmatprep.subr.mxu0 0.0
        %391 = vmatpush2.xpose.msra.mxu0 0.0
        %392 = vmatprep.subr.mxu0 0.0
        %393 = vmatpush2.xpose.msra.mxu0 0.0
        %394 = vmatprep.subr.mxu0 0.0
        %395 = vmatpush2.xpose.msra.mxu0 0.0
        %396 = vmatprep.subr.mxu0 0.0
        %397 = vmatpush2.xpose.msra.mxu0 0.0
        %398 = vmatprep.subr.mxu0 0.0
        %399 = vmatpush2.xpose.msra.mxu0 0.0
        %400 = vmatprep.subr.mxu0 0.0
        %401 = vmatpush2.xpose.msra.mxu0 0.0
        %402 = vmatprep.subr.mxu0 0.0
        %403 = vmatpush2.xpose.msra.mxu0 0.0
        %404 = vmatprep.subr.mxu0 0.0
        %405 = vmatpush2.xpose.msra.mxu0 0.0
        %406 = vmatprep.subr.mxu0 0.0
        %407 = vmatpush2.xpose.msra.mxu0 0.0
        %408 = vmatprep.subr.mxu0 0.0
        %409 = vmatpush2.xpose.msra.mxu0 0.0
        %410 = vmatprep.subr.mxu0 0.0
        %411 = vmatpush2.xpose.msra.mxu0 0.0
        %412 = vmatprep.subr.mxu0 0.0
        %413 = vmatpush2.xpose.msra.mxu0 0.0
        %414 = vmatprep.subr.mxu0 0.0
        %415 = vmatpush2.xpose.msra.mxu0 0.0
        %416 = vmatprep.mubr.f32.mxu0 0.0
        %417 = vmatmul.mubr.f32.gmra.mxu0 %v347
        %v418 = vpop.f32.mrf.mxu0
        %v419 = vadd.f32 0.0, %v418
        %v420 = vpop.f32.mrf.mxu0
        %421 = vdwg.mxu0
        %v422 = vmul.f32 %v419, 0.17677669
        %v423 = vld [vmem:[%s332] sm:$0xff]
        %vm424 = vcmp.gt.f32.partialorder %v423, 0.0
        %v425 = vsel %vm424, 1, 0
        %426 = vset.pattern.permute.xlu0 0
        %427 = vperm.xlu0 %426, %v425
        %v428 = vpop.permute.xlu0 %427
        %vm429 = vcmp.eq.s32.totalorder %v428, 1
        %v430 = vsel %vm429, %v422, -inf
        %v431 = vld [vmem:[#allocation2] sm:$0xff]
        %vm432 = vcmask 64512
        %v433 = vsel %vm432, %v430, -inf
        %434 = vmax.xlane.f32.xlu0 %v433
        %v435 = vpop.xlane.xlu0 %434
        %v436 = vmax.f32 %v431, %v435
        %vm437 = vcmp.eq.f32.partialorder %v436, -inf
        %v438 = vsel %vm437, 0.0, %v436
        %v439 = vsub.f32 %v431, %v438
        %v440 = vmul.f32 %v439, 1.442695
        %v441 = vpow.pop %v440
        %443 = vset.pattern.permute.xlu0 0
        %444 = vperm.xlu0 %443, %v438
        %v445 = vpop.permute.xlu0 %444
        %v447 = vsub.f32 %v430, %v445
        %v448 = vmul.f32 %v447, 1.442695
        %v449 = vpow.pop %v448
        %v450 = vld [vmem:[#allocation3] sm:$0xff]
        %v451 = vmul.f32 %v441, %v450
        %v452 = vsel %vm432, %v449, 0.0
        %453 = vadd.xlane.f32.xlu0 %v452
        %v454 = vpop.xlane.xlu0 %453
        %v455 = vadd.f32 %v451, %v454
        %vm456 = vcmask 7168
        %457 = vst.msk [vmem:[#allocation3] sm:$0xff] %vm456, %v455
        %v458 = vld [vmem:[#allocation4] sm:$0xff]
        %460 = vset.pattern.permute.xlu0 0
        %461 = vperm.xlu0 %460, %v441
        %v462 = vpop.permute.xlu0 %461
        %v464 = vmul.f32 %v462, %v458
        %v466 = vsel %vm432, %v449, 0
        %468 = vmatprep.subr.mxu0 0.0
        %469 = vmatpush1.msra.mxu0 0.0
        %470 = vmatprep.subr.mxu0 0.0
        %471 = vmatpush1.msra.mxu0 0.0
        %472 = vmatprep.subr.mxu0 0.0
        %473 = vmatpush1.msra.mxu0 0.0
        %474 = vmatprep.subr.mxu0 0.0
        %475 = vmatpush1.msra.mxu0 0.0
        %476 = vmatprep.subr.mxu0 0.0
        %477 = vmatpush1.msra.mxu0 0.0
        %478 = vmatprep.subr.mxu0 0.0
        %479 = vmatpush1.msra.mxu0 0.0
        %480 = vmatprep.subr.mxu0 0.0
        %481 = vmatpush1.msra.mxu0 0.0
        %482 = vmatprep.subr.mxu0 0.0
        %483 = vmatpush1.msra.mxu0 0.0
        %484 = vmatprep.subr.mxu0 0.0
        %485 = vmatpush1.msra.mxu0 0.0
        %486 = vmatprep.subr.mxu0 0.0
        %487 = vmatpush1.msra.mxu0 0.0
        %488 = vmatprep.subr.mxu0 0.0
        %489 = vmatpush1.msra.mxu0 0.0
        %490 = vmatprep.subr.mxu0 0.0
        %491 = vmatpush1.msra.mxu0 0.0
        %492 = vmatprep.subr.mxu0 0.0
        %493 = vmatpush1.msra.mxu0 0.0
        %494 = vmatprep.subr.mxu0 0.0
        %495 = vmatpush1.msra.mxu0 0.0
        %496 = vmatprep.subr.mxu0 0.0
        %497 = vmatpush1.msra.mxu0 0.0
        %498 = vmatprep.subr.mxu0 0.0
        %499 = vmatpush1.msra.mxu0 %v344
        %500 = vmatprep.subr.mxu0 0.0
        %501 = vmatpush2.msra.mxu0 0.0
        %502 = vmatprep.subr.mxu0 0.0
        %503 = vmatpush2.msra.mxu0 0.0
        %504 = vmatprep.subr.mxu0 0.0
        %505 = vmatpush2.msra.mxu0 0.0
        %506 = vmatprep.subr.mxu0 0.0
        %507 = vmatpush2.msra.mxu0 0.0
        %508 = vmatprep.subr.mxu0 0.0
        %509 = vmatpush2.msra.mxu0 0.0
        %510 = vmatprep.subr.mxu0 0.0
        %511 = vmatpush2.msra.mxu0 0.0
        %512 = vmatprep.subr.mxu0 0.0
        %513 = vmatpush2.msra.mxu0 0.0
        %514 = vmatprep.subr.mxu0 0.0
        %515 = vmatpush2.msra.mxu0 0.0
        %516 = vmatprep.subr.mxu0 0.0
        %517 = vmatpush2.msra.mxu0 0.0
        %518 = vmatprep.subr.mxu0 0.0
        %519 = vmatpush2.msra.mxu0 0.0
        %520 = vmatprep.subr.mxu0 0.0
        %521 = vmatpush2.msra.mxu0 0.0
        %522 = vmatprep.subr.mxu0 0.0
        %523 = vmatpush2.msra.mxu0 0.0
        %524 = vmatprep.subr.mxu0 0.0
        %525 = vmatpush2.msra.mxu0 0.0
        %526 = vmatprep.subr.mxu0 0.0
        %527 = vmatpush2.msra.mxu0 0.0
        %528 = vmatprep.subr.mxu0 0.0
        %529 = vmatpush2.msra.mxu0 0.0
        %530 = vmatprep.subr.mxu0 0.0
        %531 = vmatpush2.msra.mxu0 0.0
        %532 = vmatprep.mubr.f32.mxu0 0.0
        %533 = vmatmul.mubr.f32.gmra.mxu0 %v466
        %v534 = vpop.f32.mrf.mxu0
        %v535 = vadd.f32 0.0, %v534
        %v536 = vpop.f32.mrf.mxu0
        %537 = vdwg.mxu0
        %v538 = vadd.f32 %v464, %v535
        %539 = vst.msk [vmem:[#allocation4] sm:$0xff] %vm345, %v538
        %540 = vst.msk [vmem:[#allocation2] sm:$0xff] %vm456, %v436
        // Predicated region
        $region49: #{_attention_call.1} parent=35 // pred_check
          %p541 = pneg %p333
        $region50: #{_attention_call.1} parent=35 // pred_check_branch
          %543 = sbr.rel (%p541) target = $region52
        $region51: #{_attention_call.1} parent=35 // pred_region
          %v544 = vld [vmem:[#allocation3] sm:$0xff]
          %v545 = vld [vmem:[#allocation4] sm:$0xff]
          %v546 = vrcp.pop %v544
          %548 = vset.pattern.permute.xlu0 0
          %549 = vperm.xlu0 %548, %v546
          %v550 = vpop.permute.xlu0 %549
          %v552 = vmul.f32 %v545, %v550
          %vm553 = vcmp.ne.f32.partialorder %v552, %v552
          %v554 = vsel %vm553, 0.0, %v552
          %555 = vst.msk [vmem:[%s318] sm:$0xff] %vm345, %v554
        $region52: #{_attention_call.1} parent=35 // pred_fallthru
          _
        %s556 = sand.u32 %s165, 1
        %s557 = scalar_lea.sflag [#allocation7], %s556
        %s558 = sand.u32 %s165, 1
        %s559 = smul.addr %s558, 8
        %s560 = scalar_lea.vmem [#allocation10], %s559
        // Predicated region
        $region53: #{_attention_call.1} parent=35 // pred_check
          %p561 = pneg %p175
        $region54: #{_attention_call.1} parent=35 // pred_check_branch
          %563 = sbr.rel (%p561) target = $region56
        $region55: #{_attention_call.1} parent=35 // pred_region
          %s565 = ssub.s32 128, 128
          %566 = vsyncadd %s557, %s565
          %s567 = sadd.s32 %s30, %s29
          %s568 = smul.addr %s567, 128
          %s569 = scalar_lea.hbm %s4, %s568
          %s571 = sshll.u32 %s560, 4
          %s572 = int_to_ptr.vmem [resolvable:$true] %s571
          %574 = dma.vmem_to_hbm [thread:$0]  %s572, 128, %s569, %s557
        $region56: #{_attention_call.1} parent=35 // pred_fallthru
          _
      $region36: #{_attention_call.1} parent=5 // pred_fallthru
        _
      %p575 = scmp.le.s32.totalorder 2, %s19
      // Predicated region
      $region57: #{_attention_call.1} parent=5 // pred_check
        %p576 = pneg %p575
      $region58: #{_attention_call.1} parent=5 // pred_check_branch
        %578 = sbr.rel (%p576) target = $region60
      $region59: #{_attention_call.1} parent=5 // pred_region
        %s579 = ssub.s32 %s19, 2
        // Predicated region
        $region61: #{_attention_call.1} parent=59 // pred_check
          %p580 = pneg %p181
        $region62: #{_attention_call.1} parent=59 // pred_check_branch
          %582 = sbr.rel (%p580) target = $region64
        $region63: #{_attention_call.1} parent=59 // pred_region
          %s583 = sand.u32 %s166, 1
          %s584 = scalar_lea.sflag [#allocation7], %s583
          %s585 = sand.u32 %s166, 1
          %s586 = smul.addr %s585, 8
          %s587 = scalar_lea.vmem [#allocation10], %s586
          %588 = dma.done %s584, 128
        $region64: #{_attention_call.1} parent=59 // pred_fallthru
          _
      $region60: #{_attention_call.1} parent=5 // pred_fallthru
        _
    $region6: #{_attention_call.1} parent=1 // loop_footer
      %s23 = sadd.s32 1, %s19
    $region7: #{_attention_call.1} parent=1 // loop_footer_branch
      %18 = sbr.rel target = $region3
    $region8: #{_attention_call.1} parent=1 // loop_exit
      _
    %589 = vsyncpa [#allocation6], 1
    %s590 = scalar_lea.sflag [#allocation6], 1
    %591 = vsyncpa %s590, 1
    %592 = vsyncpa [#allocation9], 1
    %s593 = scalar_lea.sflag [#allocation9], 1
    %594 = vsyncpa %s593, 1
    %595 = vsyncpa [#allocation7], 1
    %s596 = scalar_lea.sflag [#allocation7], 1
    %597 = vsyncpa %s596, 1

</llo_original>
